<compile_context>
chip_gen: v6e
topology: v6e:2x2x1
jax: 0.10.0
libtpu: 0.0.40
codegen_flags: <defaults>
</compile_context>

<pallas_src>
import functools

import jax
import jax.numpy as jnp
from jax.experimental import pallas as pl
from jax.experimental.pallas import tpu as pltpu

_LANE = 128      # vreg lane width
_SUBLANE = 8     # f32 sublane count


def _round_up(n, m):
    return (n + m - 1) // m * m


def _vmem_budget_bytes():
    """Generation-aware VMEM budget: physical capacity minus ~12.5% headroom
    for Mosaic internal scratch / spill (v5e/v6e: 128 MiB, v7x: 64 MiB)."""
    cap = 64 * 1024 * 1024  # conservative fallback = v7x per-TC VMEM
    try:
        cap = int(pltpu.get_tpu_info().vmem_capacity_bytes)
    except Exception:
        pass
    return (cap * 7) // 8


def _num_tensorcores():
    """TensorCores a single Pallas kernel can shard a "parallel" axis over."""
    try:
        info = pltpu.get_tpu_info()
        for attr in ("num_cores", "core_count", "tensorcore_count",
                     "num_tensorcores"):
            n = getattr(info, attr, None)
            if n:
                return int(n)
    except Exception:
        pass
    try:
        kind = jax.devices()[0].device_kind.lower()
        if any(tag in kind for tag in ("v7", "v5p", "v4")):
            return 2  # megacore / dual-TC chips
    except Exception:
        pass
    return 1  # v5e / v6e


def _mlp_kernel(x_ref, w1_ref, b1_ref, w2_ref, b2_ref, o_ref):
    """Fused  relu(x @ W1 + b1) @ W2 + b2  on one batch tile.

    x arrives in its HBM dtype (f32) and is cast to the MXU dtype on the VPU
    (cheap, hidden under DMA/MXU).  Accumulation, bias add and ReLU stay in
    f32 (v5e-friendly: no bf16 elementwise math), output cast on store.
    """
    x = x_ref[...].astype(w1_ref.dtype)
    h = jnp.dot(x, w1_ref[...], preferred_element_type=jnp.float32)
    h = jnp.maximum(h + b1_ref[...], 0.0)                       # f32 epilogue
    y = jnp.dot(h.astype(w2_ref.dtype), w2_ref[...],
                preferred_element_type=jnp.float32)
    # TODO(synk): if the consumer tolerates bf16 activations, emit o_ref in
    # bf16 (halves the dominant output HBM stream); kept f32 to match the
    # wrapped module's output dtype.
    o_ref[...] = (y + b2_ref[...]).astype(o_ref.dtype)


def _pick_tile_b(B, Din_p, Dh_p, Dout_p, x_bytes, out_bytes, w_bytes,
                 num_cores, vmem_budget, tile_b_hint):
    """Pick the batch tile: biggest that fits VMEM, with an even multiple of
    `num_cores` grid steps on multi-TC chips (so no TensorCore idles)."""
    B8 = _round_up(max(B, 1), _SUBLANE)
    resident = ((Din_p * Dh_p + Dh_p * Dout_p) * w_bytes     # W1, W2 (bf16, 1 buf)
                + (Dh_p + Dout_p) * 4)                       # biases (f32, 1 buf)
    per_row = (2 * Din_p * x_bytes          # x tile, double-buffered
               + 2 * Dout_p * out_bytes     # out tile, double-buffered
               + Din_p * w_bytes            # in-kernel bf16 copy of x
               + Dh_p * (4 + w_bytes)       # h (f32) + bf16 copy of h
               + Dout_p * 4)                # y (f32)
    max_rows = (vmem_budget - resident) // per_row
    max_rows = (max_rows // _SUBLANE) * _SUBLANE
    if max_rows < _SUBLANE:
        # TODO(synk): for weights too large to stay VMEM-resident, add a
        # K-tiling grid axis over Din/Dh (K tile a multiple of 256 on v6e/v7x)
        # with an f32 accumulator scratch and "arbitrary" semantics.
        raise ValueError(
            "resident weights leave no VMEM for a batch tile; add K-tiling")
    if num_cores <= 1:
        # single TC: cover the whole batch when it fits (amortize ~0.35us/step)
        tile = min(B8, max_rows)
    else:
        # multi TC: keep the grid length an even multiple of num_cores
        cap = max(_SUBLANE, min(tile_b_hint, max_rows))
        steps = _round_up(max(num_cores, pl.cdiv(B8, cap)), num_cores)
        tile = min(_round_up(pl.cdiv(B8, steps), _SUBLANE), max_rows)
    return max(_SUBLANE, tile)


@functools.partial(jax.jit, static_argnames=("dout", "tile_b_hint"))
def _mlp_forward_padded(x, w1_p, b1_p, w2_p, b2_p, *, dout, tile_b_hint=512):
    """relu(x @ W1 + b1) @ W2 + b2 with pre-padded, pre-cast (bf16) weights.

    * x keeps its original dtype (cast to bf16 inside the kernel).
    * Only x's feature axis is zero-padded, and only when misaligned (padded
      columns must be zero so they meet W1's zero rows exactly).
    * The batch axis is never padded: Pallas handles the partial edge block.
      This is safe ONLY because rows are independent (no cross-row reduction);
      garbage rows in the edge input block only produce discarded output rows.
    """
    B, Din = x.shape
    Din_p, Dh_p = w1_p.shape
    Dout_p = w2_p.shape[1]
    out_dtype = x.dtype

    if Din_p != Din:
        x = jnp.pad(x, ((0, 0), (0, Din_p - Din)))

    num_cores = _num_tensorcores()
    vmem_budget = _vmem_budget_bytes()
    tile_b = _pick_tile_b(
        B, Din_p, Dh_p, Dout_p,
        jnp.dtype(x.dtype).itemsize, jnp.dtype(out_dtype).itemsize,
        jnp.dtype(w1_p.dtype).itemsize,
        num_cores, vmem_budget, tile_b_hint)
    grid = (pl.cdiv(B, tile_b),)

    def _resident(shape):
        # Grid-invariant operand: constant index_map + single buffering
        # (default pipelining would double-buffer it for nothing).
        zeros = (0,) * len(shape)
        return pl.BlockSpec(shape, lambda i: zeros,
                            pipeline_mode=pl.Buffered(1))

    out = pl.pallas_call(
        _mlp_kernel,
        out_shape=jax.ShapeDtypeStruct((B, Dout_p), out_dtype),
        grid_spec=pltpu.PrefetchScalarGridSpec(
            num_scalar_prefetch=0,
            grid=grid,
            in_specs=[
                pl.BlockSpec((tile_b, Din_p), lambda i: (i, 0)),   # x tile
                _resident((Din_p, Dh_p)),                          # W1 (resident)
                _resident((1, Dh_p)),                              # b1
                _resident((Dh_p, Dout_p)),                         # W2 (resident)
                _resident((1, Dout_p)),                            # b2
            ],
            out_specs=pl.BlockSpec((tile_b, Dout_p), lambda i: (i, 0)),
        ),
        compiler_params=pltpu.CompilerParams(
            dimension_semantics=("parallel",),   # batch axis shards across TCs
            vmem_limit_bytes=vmem_budget,
        ),
    )(x, w1_p, b1_p, w2_p, b2_p)

    if Dout_p != dout:
        out = out[:, :dout]
    return out


class ORTModulePallas:
    """Mirror of ORTModule's wrapper behavior around a fixed 2-layer MLP.

    forward(x) returns what the wrapped module would return.  The training
    path is the fused Pallas kernel (bf16 MXU operands, f32 accumulate), and
    eval() falls back to the plain JAX forward — exactly as ORTModule falls
    back to the original torch module when not training.
    """
    # TODO(synk): ONNX export / ModuleGradientGraphBuilder / TrainingAgent
    # session + IOBinding / dlpack plumbing, the CUDA-allocator cpp extension
    # and the autograd backward bridge have no Pallas equivalent; only the
    # forward compute path is implemented.

    def __init__(self, w1, b1, w2, b2, mxu_dtype=jnp.bfloat16):
        self._is_training = True
        self.w1 = w1
        self.b1 = jnp.reshape(b1, (1, -1))
        self.w2 = w2
        self.b2 = jnp.reshape(b2, (1, -1))
        din, dh = w1.shape
        dh2, dout = w2.shape
        assert dh == dh2 and self.b1.shape[1] == dh and self.b2.shape[1] == dout
        self._dout = dout
        # Pad to the 128-lane width and cast to the MXU dtype ONCE, so there is
        # no per-call HBM read+write pass over the weights.  Zero padding is
        # exact: padded x cols hit zero W1 rows, padded hidden cols have zero
        # bias (relu(0)=0) and hit zero W2 rows, padded output cols are sliced.
        din_p, dh_p, dout_p = (_round_up(d, _LANE) for d in (din, dh, dout))
        self._w1_p = jnp.pad(w1, ((0, din_p - din), (0, dh_p - dh))).astype(mxu_dtype)
        self._w2_p = jnp.pad(w2, ((0, dh_p - dh), (0, dout_p - dout))).astype(mxu_dtype)
        self._b1_p = jnp.pad(self.b1, ((0, 0), (0, dh_p - dh))).astype(jnp.float32)
        self._b2_p = jnp.pad(self.b2, ((0, 0), (0, dout_p - dout))).astype(jnp.float32)

    def train(self, mode=True):
        self._is_training = mode
        return self

    def eval(self):
        self._is_training = False
        return self

    def __call__(self, x):
        if self._is_training:
            return _mlp_forward_padded(x, self._w1_p, self._b1_p,
                                       self._w2_p, self._b2_p, dout=self._dout)
        # eval: the wrapped module's original forward (ORTModule fallback path)
        h = jnp.maximum(x @ self.w1 + self.b1, 0.0)
        return h @ self.w2 + self.b2


if __name__ == "__main__":
    # Small, lane-aligned demo shapes (feature dims multiples of 128).
    B, Din, Dh, Dout = 512, 128, 256, 128

    key = jax.random.PRNGKey(0)
    kx, k1, k2, k3, k4 = jax.random.split(key, 5)
    x = jax.random.normal(kx, (B, Din), dtype=jnp.float32)
    w1 = jax.random.normal(k1, (Din, Dh), dtype=jnp.float32) * 0.05
    b1 = jax.random.normal(k2, (1, Dh), dtype=jnp.float32) * 0.1
    w2 = jax.random.normal(k3, (Dh, Dout), dtype=jnp.float32) * 0.05
    b2 = jax.random.normal(k4, (1, Dout), dtype=jnp.float32) * 0.1

    model = ORTModulePallas(w1, b1, w2, b2).train(True)
    out = jax.block_until_ready(model(x))

    # Pure-JAX reference with the same bf16 MXU operands + f32 accumulate.
    xb, w1b, w2b = (t.astype(jnp.bfloat16) for t in (x, w1, w2))
    h_ref = jnp.maximum(
        jnp.dot(xb, w1b, preferred_element_type=jnp.float32) + b1, 0.0)
    ref = jnp.dot(h_ref.astype(jnp.bfloat16), w2b,
                  preferred_element_type=jnp.float32) + b2

    assert out.shape == (B, Dout)
    assert jnp.allclose(out, ref, atol=2e-2, rtol=2e-2), \
        float(jnp.max(jnp.abs(out - ref)))

    # Ragged batch (not a multiple of the tile / sublane count) exercises the
    # un-padded partial-edge-block path.
    out_r = jax.block_until_ready(model(x[:300]))
    assert out_r.shape == (300, Dout)
    assert jnp.allclose(out_r, ref[:300], atol=2e-2, rtol=2e-2)

    # eval() falls back to the wrapped module's plain forward (ORTModule behavior).
    out_eval = jax.block_until_ready(model.eval()(x[:16]))
    assert out_eval.shape == (16, Dout)

    print("KERNEL_OK")
</pallas_src>

<mosaic_0001>
module attributes {stable_mosaic.version = 11 : i64} {
  func.func @_mlp_kernel(%arg0: i32, %arg1: memref<512x128xf32, #tpu.memory_space<vmem>>, %arg2: memref<128x256xbf16, #tpu.memory_space<vmem>>, %arg3: memref<1x256xf32, #tpu.memory_space<vmem>>, %arg4: memref<256x128xbf16, #tpu.memory_space<vmem>>, %arg5: memref<1x128xf32, #tpu.memory_space<vmem>>, %arg6: memref<512x128xf32, #tpu.memory_space<vmem>>) attributes {dimension_semantics = [#tpu.dimension_semantics<parallel>], iteration_bounds = array<i64: 1>, scalar_prefetch = 0 : i64, scratch_operands = 0 : i64, tpu.core_type = #tpu.core_type<tc>, window_params = [{transform_indices = @transform_0, window_bounds = array<i64: 512, 128>}, {pipeline_mode = #tpu.pipeline_mode<synchronous>, transform_indices = @transform_1, window_bounds = array<i64: 128, 256>}, {pipeline_mode = #tpu.pipeline_mode<synchronous>, transform_indices = @transform_2, window_bounds = array<i64: 1, 256>}, {pipeline_mode = #tpu.pipeline_mode<synchronous>, transform_indices = @transform_3, window_bounds = array<i64: 256, 128>}, {pipeline_mode = #tpu.pipeline_mode<synchronous>, transform_indices = @transform_4, window_bounds = array<i64: 1, 128>}, {transform_indices = @transform_5, window_bounds = array<i64: 512, 128>}]} {
    %c0 = arith.constant 0 : index
    %c0_0 = arith.constant 0 : index
    %0 = vector.load %arg1[%c0, %c0_0] : memref<512x128xf32, #tpu.memory_space<vmem>>, vector<512x128xf32>
    %1 = arith.truncf %0 : vector<512x128xf32> to vector<512x128xbf16>
    %c0_1 = arith.constant 0 : index
    %c0_2 = arith.constant 0 : index
    %2 = vector.load %arg2[%c0_1, %c0_2] : memref<128x256xbf16, #tpu.memory_space<vmem>>, vector<128x256xbf16>
    %cst = arith.constant dense<0.000000e+00> : vector<512x256xf32>
    %3 = tpu.matmul %1, %2, %cst {dimension_numbers = #tpu.dot_dimension_numbers<[1], [0], [0], [1], [0, 0, 1, 1], [], []>} : vector<512x128xbf16>, vector<128x256xbf16>, vector<512x256xf32> -> vector<512x256xf32>
    %c0_3 = arith.constant 0 : index
    %c0_4 = arith.constant 0 : index
    %4 = vector.load %arg3[%c0_3, %c0_4] : memref<1x256xf32, #tpu.memory_space<vmem>>, vector<1x256xf32>
    %5 = vector.broadcast %4 : vector<1x256xf32> to vector<512x256xf32>
    %6 = arith.addf %3, %5 : vector<512x256xf32>
    %cst_5 = arith.constant 0.000000e+00 : f32
    %7 = vector.broadcast %cst_5 : f32 to vector<512x256xf32>
    %8 = arith.maximumf %6, %7 : vector<512x256xf32>
    %9 = arith.truncf %8 : vector<512x256xf32> to vector<512x256xbf16>
    %c0_6 = arith.constant 0 : index
    %c0_7 = arith.constant 0 : index
    %10 = vector.load %arg4[%c0_6, %c0_7] : memref<256x128xbf16, #tpu.memory_space<vmem>>, vector<256x128xbf16>
    %cst_8 = arith.constant dense<0.000000e+00> : vector<512x128xf32>
    %11 = tpu.matmul %9, %10, %cst_8 {dimension_numbers = #tpu.dot_dimension_numbers<[1], [0], [0], [1], [0, 0, 1, 1], [], []>} : vector<512x256xbf16>, vector<256x128xbf16>, vector<512x128xf32> -> vector<512x128xf32>
    %c0_9 = arith.constant 0 : index
    %c0_10 = arith.constant 0 : index
    %12 = vector.load %arg5[%c0_9, %c0_10] : memref<1x128xf32, #tpu.memory_space<vmem>>, vector<1x128xf32>
    %13 = vector.broadcast %12 : vector<1x128xf32> to vector<512x128xf32>
    %14 = arith.addf %11, %13 : vector<512x128xf32>
    %c0_11 = arith.constant 0 : index
    %c0_12 = arith.constant 0 : index
    %15 = vector.load %arg6[%c0_11, %c0_12] : memref<512x128xf32, #tpu.memory_space<vmem>>, vector<512x128xf32>
    tpu.vector_store %arg6[%c0_11, %c0_12], %14 {strides = array<i32>} : memref<512x128xf32, #tpu.memory_space<vmem>>, vector<512x128xf32>,
    return
  }
  func.func @transform_0(%arg0: i32) -> (i32, i32) {
    %c0_i32 = arith.constant 0 : i32
    %c0_i32_0 = arith.constant 0 : i32
    return %arg0, %c0_i32 : i32, i32
  }
  func.func @transform_1(%arg0: i32) -> (i32, i32) {
    %c0_i32 = arith.constant 0 : i32
    %c0_i32_0 = arith.constant 0 : i32
    %c0_i32_1 = arith.constant 0 : i32
    return %c0_i32, %c0_i32_0 : i32, i32
  }
  func.func @transform_2(%arg0: i32) -> (i32, i32) {
    %c0_i32 = arith.constant 0 : i32
    %c0_i32_0 = arith.constant 0 : i32
    %c0_i32_1 = arith.constant 0 : i32
    return %c0_i32, %c0_i32_0 : i32, i32
  }
  func.func @transform_3(%arg0: i32) -> (i32, i32) {
    %c0_i32 = arith.constant 0 : i32
    %c0_i32_0 = arith.constant 0 : i32
    %c0_i32_1 = arith.constant 0 : i32
    return %c0_i32, %c0_i32_0 : i32, i32
  }
  func.func @transform_4(%arg0: i32) -> (i32, i32) {
    %c0_i32 = arith.constant 0 : i32
    %c0_i32_0 = arith.constant 0 : i32
    %c0_i32_1 = arith.constant 0 : i32
    return %c0_i32, %c0_i32_0 : i32, i32
  }
  func.func @transform_5(%arg0: i32) -> (i32, i32) {
    %c0_i32 = arith.constant 0 : i32
    %c0_i32_0 = arith.constant 0 : i32
    return %arg0, %c0_i32 : i32, i32
  }
}

</mosaic_0001>

<llo_original>
// kernel: _mlp_forward_padded.1
$region0: #{_mlp_forward_padded.1}
  #allocation0 [shape = 'u32[]', space=smem, size = 0x4, offset = 0x4, fixed_abs, tag = 'smem constant byte address 0x4 - core index']
  #allocation1 [shape = 'u32[144,128]{1,0:T(1,128)}', space=vmem, size = 0x12000, scoped, tag = 'internal scratch']
  %s0 = inlined_call_operand.hbm [shape: f32[512,128], index: 0, kind: input, shape index: {}]
  %s1 = inlined_call_operand.hbm [shape: bf16[128,256], index: 1, kind: input, shape index: {}]
  %s2 = inlined_call_operand.vmem [shape: f32[1,256], index: 2, kind: input, shape index: {}]
  %s3 = inlined_call_operand.hbm [shape: bf16[256,128], index: 3, kind: input, shape index: {}]
  %s4 = inlined_call_operand.vmem [shape: f32[1,128], index: 4, kind: input, shape index: {}]
  %s5 = inlined_call_operand.hbm [shape: f32[512,128], index: 5, kind: output, shape index: {}]
  %s6 = sld [smem:[#allocation0]]
  $region42: #{_mlp_forward_padded.1} parent=0
    _
  %s8 = ssub.s32 1, %s6
  %s9 = scalar_select 0, %s8, %s6
  $region1: #{_mlp_forward_padded.1} parent=0
    #allocation2 [shape = 'u8[262144]{0}', space=vmem, size = 0x40000, scoped, tag = 'input window, operand 0, single buffered']
    #allocation3 [shape = 's32[1]{0}', space=sflag, size = 0x4, scoped, tag = 'scoped memory for _mlp_forward_padded.1']
    #allocation4 [shape = 's32[1]{0}', space=sflag, size = 0x4, scoped, tag = 'scoped memory for _mlp_forward_padded.1']
    #allocation5 [shape = 'u8[65536]{0}', space=vmem, size = 0x10000, scoped, tag = 'input window, operand 1, single buffered']
    #allocation6 [shape = 's32[1]{0}', space=sflag, size = 0x4, scoped, tag = 'scoped memory for _mlp_forward_padded.1']
    #allocation7 [shape = 'u8[65536]{0}', space=vmem, size = 0x10000, scoped, tag = 'input window, operand 3, single buffered']
    #allocation8 [shape = 'u8[262144]{0}', space=vmem, size = 0x40000, scoped, tag = 'output window, operand 0, single buffered']
    %10 = vsyncpa [#allocation3], 0
    %11 = vsyncpa [#allocation6], 0
    %12 = vsyncpa [#allocation4], 0
    // Predicated region
    $region2: #{_mlp_forward_padded.1} parent=1 // pred_check
      _
    $region3: #{_mlp_forward_padded.1} parent=1 // pred_check_branch
      %14 = sbr.rel (0) target = $region5
    $region4: #{_mlp_forward_padded.1} parent=1 // pred_region
      %s16 = ssub.s32 8192, 8192
      %17 = vsyncadd [#allocation3], %s16
      %s18 = sshll.u32 [#allocation2], 4
      %s19 = int_to_ptr.vmem [resolvable:$true] %s18
      %24 = dma.hbm_to_vmem [thread:$0]  %s0, 8192, %s19, [#allocation3], 128, 128, 8
    $region5: #{_mlp_forward_padded.1} parent=1 // pred_fallthru
      _
    // Predicated region
    $region6: #{_mlp_forward_padded.1} parent=1 // pred_check
      _
    $region7: #{_mlp_forward_padded.1} parent=1 // pred_check_branch
      %26 = sbr.rel (0) target = $region9
    $region8: #{_mlp_forward_padded.1} parent=1 // pred_region
      %s28 = ssub.s32 2048, 2048
      %29 = vsyncadd [#allocation6], %s28
      %s30 = sshll.u32 [#allocation5], 4
      %s31 = int_to_ptr.vmem [resolvable:$true] %s30
      %36 = dma.hbm_to_vmem [thread:$0]  %s1, 2048, %s31, [#allocation6], 128, 128, 8
    $region9: #{_mlp_forward_padded.1} parent=1 // pred_fallthru
      _
    // Predicated region
    $region10: #{_mlp_forward_padded.1} parent=1 // pred_check
      _
    $region11: #{_mlp_forward_padded.1} parent=1 // pred_check_branch
      %38 = sbr.rel (0) target = $region13
    $region12: #{_mlp_forward_padded.1} parent=1 // pred_region
      _
    $region13: #{_mlp_forward_padded.1} parent=1 // pred_fallthru
      _
    // Predicated region
    $region14: #{_mlp_forward_padded.1} parent=1 // pred_check
      _
    $region15: #{_mlp_forward_padded.1} parent=1 // pred_check_branch
      %40 = sbr.rel (0) target = $region17
    $region16: #{_mlp_forward_padded.1} parent=1 // pred_region
      %s42 = ssub.s32 2048, 2048
      %43 = vsyncadd [#allocation6], %s42
      %s44 = sshll.u32 [#allocation7], 4
      %s45 = int_to_ptr.vmem [resolvable:$true] %s44
      %50 = dma.hbm_to_vmem [thread:$0]  %s3, 2048, %s45, [#allocation6], 64, 64, 4
    $region17: #{_mlp_forward_padded.1} parent=1 // pred_fallthru
      _
    // Predicated region
    $region18: #{_mlp_forward_padded.1} parent=1 // pred_check
      _
    $region19: #{_mlp_forward_padded.1} parent=1 // pred_check_branch
      %52 = sbr.rel (0) target = $region21
    $region20: #{_mlp_forward_padded.1} parent=1 // pred_region
      _
    $region21: #{_mlp_forward_padded.1} parent=1 // pred_fallthru
      _
    // Predicated region
    $region22: #{_mlp_forward_padded.1} parent=1 // pred_check
      _
    $region23: #{_mlp_forward_padded.1} parent=1 // pred_check_branch
      %54 = sbr.rel (0) target = $region25
    $region24: #{_mlp_forward_padded.1} parent=1 // pred_region
      %55 = dma.done [#allocation3], 8192
    $region25: #{_mlp_forward_padded.1} parent=1 // pred_fallthru
      _
    // Predicated region
    $region26: #{_mlp_forward_padded.1} parent=1 // pred_check
      _
    $region27: #{_mlp_forward_padded.1} parent=1 // pred_check_branch
      %57 = sbr.rel (0) target = $region29
    $region28: #{_mlp_forward_padded.1} parent=1 // pred_region
      %58 = dma.done [#allocation6], 2048
    $region29: #{_mlp_forward_padded.1} parent=1 // pred_fallthru
      _
    // Predicated region
    $region30: #{_mlp_forward_padded.1} parent=1 // pred_check
      _
    $region31: #{_mlp_forward_padded.1} parent=1 // pred_check_branch
      %60 = sbr.rel (0) target = $region33
    $region32: #{_mlp_forward_padded.1} parent=1 // pred_region
      %61 = dma.done [#allocation6], 2048
    $region33: #{_mlp_forward_padded.1} parent=1 // pred_fallthru
      _
    %v63 = vld [vmem:[#allocation2] sm:$0xff]
    %v64 = vld [vmem:[#allocation2 + $0x8] sm:$0xff]
    %v65 = vld [vmem:[#allocation2 + $0x10] sm:$0xff]
    %v66 = vld [vmem:[#allocation2 + $0x18] sm:$0xff]
    %v67 = vld [vmem:[#allocation2 + $0x20] sm:$0xff]
    %v68 = vld [vmem:[#allocation2 + $0x28] sm:$0xff]
    %v69 = vld [vmem:[#allocation2 + $0x30] sm:$0xff]
    %v70 = vld [vmem:[#allocation2 + $0x38] sm:$0xff]
    %v71 = vld [vmem:[#allocation2 + $0x40] sm:$0xff]
    %v72 = vld [vmem:[#allocation2 + $0x48] sm:$0xff]
    %v73 = vld [vmem:[#allocation2 + $0x50] sm:$0xff]
    %v74 = vld [vmem:[#allocation2 + $0x58] sm:$0xff]
    %v75 = vld [vmem:[#allocation2 + $0x60] sm:$0xff]
    %v76 = vld [vmem:[#allocation2 + $0x68] sm:$0xff]
    %v77 = vld [vmem:[#allocation2 + $0x70] sm:$0xff]
    %v78 = vld [vmem:[#allocation2 + $0x78] sm:$0xff]
    %v79 = vld [vmem:[#allocation2 + $0x80] sm:$0xff]
    %v80 = vld [vmem:[#allocation2 + $0x88] sm:$0xff]
    %v81 = vld [vmem:[#allocation2 + $0x90] sm:$0xff]
    %v82 = vld [vmem:[#allocation2 + $0x98] sm:$0xff]
    %v83 = vld [vmem:[#allocation2 + $0xa0] sm:$0xff]
    %v84 = vld [vmem:[#allocation2 + $0xa8] sm:$0xff]
    %v85 = vld [vmem:[#allocation2 + $0xb0] sm:$0xff]
    %v86 = vld [vmem:[#allocation2 + $0xb8] sm:$0xff]
    %v87 = vld [vmem:[#allocation2 + $0xc0] sm:$0xff]
    %v88 = vld [vmem:[#allocation2 + $0xc8] sm:$0xff]
    %v89 = vld [vmem:[#allocation2 + $0xd0] sm:$0xff]
    %v90 = vld [vmem:[#allocation2 + $0xd8] sm:$0xff]
    %v91 = vld [vmem:[#allocation2 + $0xe0] sm:$0xff]
    %v92 = vld [vmem:[#allocation2 + $0xe8] sm:$0xff]
    %v93 = vld [vmem:[#allocation2 + $0xf0] sm:$0xff]
    %v94 = vld [vmem:[#allocation2 + $0xf8] sm:$0xff]
    %v95 = vld [vmem:[#allocation2 + $0x100] sm:$0xff]
    %v96 = vld [vmem:[#allocation2 + $0x108] sm:$0xff]
    %v97 = vld [vmem:[#allocation2 + $0x110] sm:$0xff]
    %v98 = vld [vmem:[#allocation2 + $0x118] sm:$0xff]
    %v99 = vld [vmem:[#allocation2 + $0x120] sm:$0xff]
    %v100 = vld [vmem:[#allocation2 + $0x128] sm:$0xff]
    %v101 = vld [vmem:[#allocation2 + $0x130] sm:$0xff]
    %v102 = vld [vmem:[#allocation2 + $0x138] sm:$0xff]
    %v103 = vld [vmem:[#allocation2 + $0x140] sm:$0xff]
    %v104 = vld [vmem:[#allocation2 + $0x148] sm:$0xff]
    %v105 = vld [vmem:[#allocation2 + $0x150] sm:$0xff]
    %v106 = vld [vmem:[#allocation2 + $0x158] sm:$0xff]
    %v107 = vld [vmem:[#allocation2 + $0x160] sm:$0xff]
    %v108 = vld [vmem:[#allocation2 + $0x168] sm:$0xff]
    %v109 = vld [vmem:[#allocation2 + $0x170] sm:$0xff]
    %v110 = vld [vmem:[#allocation2 + $0x178] sm:$0xff]
    %v111 = vld [vmem:[#allocation2 + $0x180] sm:$0xff]
    %v112 = vld [vmem:[#allocation2 + $0x188] sm:$0xff]
    %v113 = vld [vmem:[#allocation2 + $0x190] sm:$0xff]
    %v114 = vld [vmem:[#allocation2 + $0x198] sm:$0xff]
    %v115 = vld [vmem:[#allocation2 + $0x1a0] sm:$0xff]
    %v116 = vld [vmem:[#allocation2 + $0x1a8] sm:$0xff]
    %v117 = vld [vmem:[#allocation2 + $0x1b0] sm:$0xff]
    %v118 = vld [vmem:[#allocation2 + $0x1b8] sm:$0xff]
    %v119 = vld [vmem:[#allocation2 + $0x1c0] sm:$0xff]
    %v120 = vld [vmem:[#allocation2 + $0x1c8] sm:$0xff]
    %v121 = vld [vmem:[#allocation2 + $0x1d0] sm:$0xff]
    %v122 = vld [vmem:[#allocation2 + $0x1d8] sm:$0xff]
    %v123 = vld [vmem:[#allocation2 + $0x1e0] sm:$0xff]
    %v124 = vld [vmem:[#allocation2 + $0x1e8] sm:$0xff]
    %v125 = vld [vmem:[#allocation2 + $0x1f0] sm:$0xff]
    %v126 = vld [vmem:[#allocation2 + $0x1f8] sm:$0xff]
    %v127 = vpack.c.bf16 %v64, %v63
    %v128 = vpack.c.bf16 %v66, %v65
    %v129 = vpack.c.bf16 %v68, %v67
    %v130 = vpack.c.bf16 %v70, %v69
    %v131 = vpack.c.bf16 %v72, %v71
    %v132 = vpack.c.bf16 %v74, %v73
    %v133 = vpack.c.bf16 %v76, %v75
    %v134 = vpack.c.bf16 %v78, %v77
    %v135 = vpack.c.bf16 %v80, %v79
    %v136 = vpack.c.bf16 %v82, %v81
    %v137 = vpack.c.bf16 %v84, %v83
    %v138 = vpack.c.bf16 %v86, %v85
    %v139 = vpack.c.bf16 %v88, %v87
    %v140 = vpack.c.bf16 %v90, %v89
    %v141 = vpack.c.bf16 %v92, %v91
    %v142 = vpack.c.bf16 %v94, %v93
    %v143 = vpack.c.bf16 %v96, %v95
    %v144 = vpack.c.bf16 %v98, %v97
    %v145 = vpack.c.bf16 %v100, %v99
    %v146 = vpack.c.bf16 %v102, %v101
    %v147 = vpack.c.bf16 %v104, %v103
    %v148 = vpack.c.bf16 %v106, %v105
    %v149 = vpack.c.bf16 %v108, %v107
    %v150 = vpack.c.bf16 %v110, %v109
    %v151 = vpack.c.bf16 %v112, %v111
    %v152 = vpack.c.bf16 %v114, %v113
    %v153 = vpack.c.bf16 %v116, %v115
    %v154 = vpack.c.bf16 %v118, %v117
    %v155 = vpack.c.bf16 %v120, %v119
    %v156 = vpack.c.bf16 %v122, %v121
    %v157 = vpack.c.bf16 %v124, %v123
    %v158 = vpack.c.bf16 %v126, %v125
    %v159 = vld [vmem:[#allocation5] sm:$0xff]
    %v160 = vld [vmem:[#allocation5 + $0x8] sm:$0xff]
    %v161 = vld [vmem:[#allocation5 + $0x10] sm:$0xff]
    %v162 = vld [vmem:[#allocation5 + $0x18] sm:$0xff]
    %v163 = vld [vmem:[#allocation5 + $0x20] sm:$0xff]
    %v164 = vld [vmem:[#allocation5 + $0x28] sm:$0xff]
    %v165 = vld [vmem:[#allocation5 + $0x30] sm:$0xff]
    %v166 = vld [vmem:[#allocation5 + $0x38] sm:$0xff]
    %v167 = vld [vmem:[#allocation5 + $0x40] sm:$0xff]
    %v168 = vld [vmem:[#allocation5 + $0x48] sm:$0xff]
    %v169 = vld [vmem:[#allocation5 + $0x50] sm:$0xff]
    %v170 = vld [vmem:[#allocation5 + $0x58] sm:$0xff]
    %v171 = vld [vmem:[#allocation5 + $0x60] sm:$0xff]
    %v172 = vld [vmem:[#allocation5 + $0x68] sm:$0xff]
    %v173 = vld [vmem:[#allocation5 + $0x70] sm:$0xff]
    %v174 = vld [vmem:[#allocation5 + $0x78] sm:$0xff]
    %v175 = vld [vmem:[%s2] sm:$0x3]
    %v177 = vlaneseq
    %v178 = vshrl.u32 %v177, 7
    %v179 = vsub.s32 0, %v178
    %v180 = vrot.slane %v175, %v179
    %v181 = vlaneseq
    %v182 = vshrl.u32 %v181, 7
    %v183 = vsub.s32 1, %v182
    %v184 = vrot.slane %v175, %v183
    %v203 = vunpack.c.l.b16 %v159
    %v204 = vunpack.c.h.b16 %v159
    %v205 = vunpack.c.l.b16 %v160
    %v206 = vunpack.c.h.b16 %v160
    %v207 = vunpack.c.l.b16 %v161
    %v208 = vunpack.c.h.b16 %v161
    %v209 = vunpack.c.l.b16 %v162
    %v210 = vunpack.c.h.b16 %v162
    %v211 = vunpack.c.l.b16 %v163
    %v212 = vunpack.c.h.b16 %v163
    %v213 = vunpack.c.l.b16 %v164
    %v214 = vunpack.c.h.b16 %v164
    %v215 = vunpack.c.l.b16 %v165
    %v216 = vunpack.c.h.b16 %v165
    %v217 = vunpack.c.l.b16 %v166
    %v218 = vunpack.c.h.b16 %v166
    %v219 = vunpack.c.l.b16 %v167
    %v220 = vunpack.c.h.b16 %v167
    %v221 = vunpack.c.l.b16 %v168
    %v222 = vunpack.c.h.b16 %v168
    %v223 = vunpack.c.l.b16 %v169
    %v224 = vunpack.c.h.b16 %v169
    %v225 = vunpack.c.l.b16 %v170
    %v226 = vunpack.c.h.b16 %v170
    %v227 = vunpack.c.l.b16 %v171
    %v228 = vunpack.c.h.b16 %v171
    %v229 = vunpack.c.l.b16 %v172
    %v230 = vunpack.c.h.b16 %v172
    %v231 = vunpack.c.l.b16 %v173
    %v232 = vunpack.c.h.b16 %v173
    %v233 = vunpack.c.l.b16 %v174
    %v234 = vunpack.c.h.b16 %v174
    %v235 = vpack.c.b16 %v205, %v203
    %v236 = vpack.c.b16 %v206, %v204
    %v237 = vpack.c.b16 %v209, %v207
    %v238 = vpack.c.b16 %v210, %v208
    %v239 = vpack.c.b16 %v213, %v211
    %v240 = vpack.c.b16 %v214, %v212
    %v241 = vpack.c.b16 %v217, %v215
    %v242 = vpack.c.b16 %v218, %v216
    %v243 = vpack.c.b16 %v221, %v219
    %v244 = vpack.c.b16 %v222, %v220
    %v245 = vpack.c.b16 %v225, %v223
    %v246 = vpack.c.b16 %v226, %v224
    %v247 = vpack.c.b16 %v229, %v227
    %v248 = vpack.c.b16 %v230, %v228
    %v249 = vpack.c.b16 %v233, %v231
    %v250 = vpack.c.b16 %v234, %v232
    %267 = vmatprep.subr.bf16.mxu0 %v250
    %268 = vmatpush1.bf16.msra.mxu0 %v249
    %269 = vmatprep.subr.bf16.mxu0 %v248
    %270 = vmatpush1.bf16.msra.mxu0 %v247
    %271 = vmatprep.subr.bf16.mxu0 %v246
    %272 = vmatpush1.bf16.msra.mxu0 %v245
    %273 = vmatprep.subr.bf16.mxu0 %v244
    %274 = vmatpush1.bf16.msra.mxu0 %v243
    %275 = vmatprep.subr.bf16.mxu0 %v242
    %276 = vmatpush1.bf16.msra.mxu0 %v241
    %277 = vmatprep.subr.bf16.mxu0 %v240
    %278 = vmatpush1.bf16.msra.mxu0 %v239
    %279 = vmatprep.subr.bf16.mxu0 %v238
    %280 = vmatpush1.bf16.msra.mxu0 %v237
    %281 = vmatprep.subr.bf16.mxu0 %v236
    %282 = vmatpush1.bf16.msra.mxu0 %v235
    %283 = vmatprep.subr.bf16.mxu0 0
    %284 = vmatpush2.bf16.msra.mxu0 0
    %285 = vmatprep.subr.bf16.mxu0 0
    %286 = vmatpush2.bf16.msra.mxu0 0
    %287 = vmatprep.subr.bf16.mxu0 0
    %288 = vmatpush2.bf16.msra.mxu0 0
    %289 = vmatprep.subr.bf16.mxu0 0
    %290 = vmatpush2.bf16.msra.mxu0 0
    %291 = vmatprep.subr.bf16.mxu0 0
    %292 = vmatpush2.bf16.msra.mxu0 0
    %293 = vmatprep.subr.bf16.mxu0 0
    %294 = vmatpush2.bf16.msra.mxu0 0
    %295 = vmatprep.subr.bf16.mxu0 0
    %296 = vmatpush2.bf16.msra.mxu0 0
    %297 = vmatprep.subr.bf16.mxu0 0
    %298 = vmatpush2.bf16.msra.mxu0 0
    %299 = vmatprep.mubr.bf16.mxu0 0
    %300 = vmatmul.mubr.bf16.gmra.mxu0 %v127
    %v301 = vpop.f32.mrf.mxu0
    %v302 = vadd.f32 %v180, %v301
    %v303 = vpop.f32.mrf.mxu0
    %v304 = vadd.f32 %v184, %v303
    %v305 = vpop.f32.mrf.mxu0
    %v306 = vadd.f32 %v180, %v305
    %v307 = vpop.f32.mrf.mxu0
    %v308 = vadd.f32 %v184, %v307
    %309 = vmatprep.mubr.bf16.mxu0 0
    %310 = vmatmul.mubr.bf16.gmra.mxu0 %v128
    %v311 = vpop.f32.mrf.mxu0
    %v312 = vadd.f32 %v180, %v311
    %v313 = vpop.f32.mrf.mxu0
    %v314 = vadd.f32 %v184, %v313
    %v315 = vpop.f32.mrf.mxu0
    %v316 = vadd.f32 %v180, %v315
    %v317 = vpop.f32.mrf.mxu0
    %v318 = vadd.f32 %v184, %v317
    %319 = vmatprep.mubr.bf16.mxu0 0
    %320 = vmatmul.mubr.bf16.gmra.mxu0 %v129
    %v321 = vpop.f32.mrf.mxu0
    %v322 = vadd.f32 %v180, %v321
    %v323 = vpop.f32.mrf.mxu0
    %v324 = vadd.f32 %v184, %v323
    %v325 = vpop.f32.mrf.mxu0
    %v326 = vadd.f32 %v180, %v325
    %v327 = vpop.f32.mrf.mxu0
    %v328 = vadd.f32 %v184, %v327
    %329 = vmatprep.mubr.bf16.mxu0 0
    %330 = vmatmul.mubr.bf16.gmra.mxu0 %v130
    %v331 = vpop.f32.mrf.mxu0
    %v332 = vadd.f32 %v180, %v331
    %v333 = vpop.f32.mrf.mxu0
    %v334 = vadd.f32 %v184, %v333
    %v335 = vpop.f32.mrf.mxu0
    %v336 = vadd.f32 %v180, %v335
    %v337 = vpop.f32.mrf.mxu0
    %v338 = vadd.f32 %v184, %v337
    %339 = vmatprep.mubr.bf16.mxu0 0
    %340 = vmatmul.mubr.bf16.gmra.mxu0 %v131
    %v341 = vpop.f32.mrf.mxu0
    %v342 = vadd.f32 %v180, %v341
    %v343 = vpop.f32.mrf.mxu0
    %v344 = vadd.f32 %v184, %v343
    %v345 = vpop.f32.mrf.mxu0
    %v346 = vadd.f32 %v180, %v345
    %v347 = vpop.f32.mrf.mxu0
    %v348 = vadd.f32 %v184, %v347
    %349 = vmatprep.mubr.bf16.mxu0 0
    %350 = vmatmul.mubr.bf16.gmra.mxu0 %v132
    %v351 = vpop.f32.mrf.mxu0
    %v352 = vadd.f32 %v180, %v351
    %v353 = vpop.f32.mrf.mxu0
    %v354 = vadd.f32 %v184, %v353
    %v355 = vpop.f32.mrf.mxu0
    %v356 = vadd.f32 %v180, %v355
    %v357 = vpop.f32.mrf.mxu0
    %v358 = vadd.f32 %v184, %v357
    %359 = vmatprep.mubr.bf16.mxu0 0
    %360 = vmatmul.mubr.bf16.gmra.mxu0 %v133
    %v361 = vpop.f32.mrf.mxu0
    %v362 = vadd.f32 %v180, %v361
    %v363 = vpop.f32.mrf.mxu0
    %v364 = vadd.f32 %v184, %v363
    %v365 = vpop.f32.mrf.mxu0
    %v366 = vadd.f32 %v180, %v365
    %v367 = vpop.f32.mrf.mxu0
    %v368 = vadd.f32 %v184, %v367
    %369 = vmatprep.mubr.bf16.mxu0 0
    %370 = vmatmul.mubr.bf16.gmra.mxu0 %v134
    %v371 = vpop.f32.mrf.mxu0
    %v372 = vadd.f32 %v180, %v371
    %v373 = vpop.f32.mrf.mxu0
    %v374 = vadd.f32 %v184, %v373
    %v375 = vpop.f32.mrf.mxu0
    %v376 = vadd.f32 %v180, %v375
    %v377 = vpop.f32.mrf.mxu0
    %v378 = vadd.f32 %v184, %v377
    %379 = vmatprep.mubr.bf16.mxu0 0
    %380 = vmatmul.mubr.bf16.gmra.mxu0 %v135
    %v381 = vpop.f32.mrf.mxu0
    %v382 = vadd.f32 %v180, %v381
    %v383 = vpop.f32.mrf.mxu0
    %v384 = vadd.f32 %v184, %v383
    %v385 = vpop.f32.mrf.mxu0
    %v386 = vadd.f32 %v180, %v385
    %v387 = vpop.f32.mrf.mxu0
    %v388 = vadd.f32 %v184, %v387
    %389 = vmatprep.mubr.bf16.mxu0 0
    %390 = vmatmul.mubr.bf16.gmra.mxu0 %v136
    %v391 = vpop.f32.mrf.mxu0
    %v392 = vadd.f32 %v180, %v391
    %v393 = vpop.f32.mrf.mxu0
    %v394 = vadd.f32 %v184, %v393
    %v395 = vpop.f32.mrf.mxu0
    %v396 = vadd.f32 %v180, %v395
    %v397 = vpop.f32.mrf.mxu0
    %v398 = vadd.f32 %v184, %v397
    %399 = vmatprep.mubr.bf16.mxu0 0
    %400 = vmatmul.mubr.bf16.gmra.mxu0 %v137
    %v401 = vpop.f32.mrf.mxu0
    %v402 = vadd.f32 %v180, %v401
    %v403 = vpop.f32.mrf.mxu0
    %v404 = vadd.f32 %v184, %v403
    %v405 = vpop.f32.mrf.mxu0
    %v406 = vadd.f32 %v180, %v405
    %v407 = vpop.f32.mrf.mxu0
    %v408 = vadd.f32 %v184, %v407
    %409 = vmatprep.mubr.bf16.mxu0 0
    %410 = vmatmul.mubr.bf16.gmra.mxu0 %v138
    %v411 = vpop.f32.mrf.mxu0
    %v412 = vadd.f32 %v180, %v411
    %v413 = vpop.f32.mrf.mxu0
    %v414 = vadd.f32 %v184, %v413
    %v415 = vpop.f32.mrf.mxu0
    %v416 = vadd.f32 %v180, %v415
    %v417 = vpop.f32.mrf.mxu0
    %v418 = vadd.f32 %v184, %v417
    %419 = vmatprep.mubr.bf16.mxu0 0
    %420 = vmatmul.mubr.bf16.gmra.mxu0 %v139
    %v421 = vpop.f32.mrf.mxu0
    %v422 = vadd.f32 %v180, %v421
    %v423 = vpop.f32.mrf.mxu0
    %v424 = vadd.f32 %v184, %v423
    %v425 = vpop.f32.mrf.mxu0
    %v426 = vadd.f32 %v180, %v425
    %v427 = vpop.f32.mrf.mxu0
    %v428 = vadd.f32 %v184, %v427
    %429 = vmatprep.mubr.bf16.mxu0 0
    %430 = vmatmul.mubr.bf16.gmra.mxu0 %v140
    %v431 = vpop.f32.mrf.mxu0
    %v432 = vadd.f32 %v180, %v431
    %v433 = vpop.f32.mrf.mxu0
    %v434 = vadd.f32 %v184, %v433
    %v435 = vpop.f32.mrf.mxu0
    %v436 = vadd.f32 %v180, %v435
    %v437 = vpop.f32.mrf.mxu0
    %v438 = vadd.f32 %v184, %v437
    %439 = vmatprep.mubr.bf16.mxu0 0
    %440 = vmatmul.mubr.bf16.gmra.mxu0 %v141
    %v441 = vpop.f32.mrf.mxu0
    %v442 = vadd.f32 %v180, %v441
    %v443 = vpop.f32.mrf.mxu0
    %v444 = vadd.f32 %v184, %v443
    %v445 = vpop.f32.mrf.mxu0
    %v446 = vadd.f32 %v180, %v445
    %v447 = vpop.f32.mrf.mxu0
    %v448 = vadd.f32 %v184, %v447
    %449 = vmatprep.mubr.bf16.mxu0 0
    %450 = vmatmul.mubr.bf16.gmra.mxu0 %v142
    %v451 = vpop.f32.mrf.mxu0
    %v452 = vadd.f32 %v180, %v451
    %v453 = vpop.f32.mrf.mxu0
    %v454 = vadd.f32 %v184, %v453
    %v455 = vpop.f32.mrf.mxu0
    %v456 = vadd.f32 %v180, %v455
    %v457 = vpop.f32.mrf.mxu0
    %v458 = vadd.f32 %v184, %v457
    %459 = vmatprep.mubr.bf16.mxu0 0
    %460 = vmatmul.mubr.bf16.gmra.mxu0 %v143
    %v461 = vpop.f32.mrf.mxu0
    %v462 = vadd.f32 %v180, %v461
    %v463 = vpop.f32.mrf.mxu0
    %v464 = vadd.f32 %v184, %v463
    %v465 = vpop.f32.mrf.mxu0
    %v466 = vadd.f32 %v180, %v465
    %v467 = vpop.f32.mrf.mxu0
    %v468 = vadd.f32 %v184, %v467
    %469 = vmatprep.mubr.bf16.mxu0 0
    %470 = vmatmul.mubr.bf16.gmra.mxu0 %v144
    %v471 = vpop.f32.mrf.mxu0
    %v472 = vadd.f32 %v180, %v471
    %v473 = vpop.f32.mrf.mxu0
    %v474 = vadd.f32 %v184, %v473
    %v475 = vpop.f32.mrf.mxu0
    %v476 = vadd.f32 %v180, %v475
    %v477 = vpop.f32.mrf.mxu0
    %v478 = vadd.f32 %v184, %v477
    %479 = vmatprep.mubr.bf16.mxu0 0
    %480 = vmatmul.mubr.bf16.gmra.mxu0 %v145
    %v481 = vpop.f32.mrf.mxu0
    %v482 = vadd.f32 %v180, %v481
    %v483 = vpop.f32.mrf.mxu0
    %v484 = vadd.f32 %v184, %v483
    %v485 = vpop.f32.mrf.mxu0
    %v486 = vadd.f32 %v180, %v485
    %v487 = vpop.f32.mrf.mxu0
    %v488 = vadd.f32 %v184, %v487
    %489 = vmatprep.mubr.bf16.mxu0 0
    %490 = vmatmul.mubr.bf16.gmra.mxu0 %v146
    %v491 = vpop.f32.mrf.mxu0
    %v492 = vadd.f32 %v180, %v491
    %v493 = vpop.f32.mrf.mxu0
    %v494 = vadd.f32 %v184, %v493
    %v495 = vpop.f32.mrf.mxu0
    %v496 = vadd.f32 %v180, %v495
    %v497 = vpop.f32.mrf.mxu0
    %v498 = vadd.f32 %v184, %v497
    %499 = vmatprep.mubr.bf16.mxu0 0
    %500 = vmatmul.mubr.bf16.gmra.mxu0 %v147
    %v501 = vpop.f32.mrf.mxu0
    %v502 = vadd.f32 %v180, %v501
    %v503 = vpop.f32.mrf.mxu0
    %v504 = vadd.f32 %v184, %v503
    %v505 = vpop.f32.mrf.mxu0
    %v506 = vadd.f32 %v180, %v505
    %v507 = vpop.f32.mrf.mxu0
    %v508 = vadd.f32 %v184, %v507
    %509 = vmatprep.mubr.bf16.mxu0 0
    %510 = vmatmul.mubr.bf16.gmra.mxu0 %v148
    %v511 = vpop.f32.mrf.mxu0
    %v512 = vadd.f32 %v180, %v511
    %v513 = vpop.f32.mrf.mxu0
    %v514 = vadd.f32 %v184, %v513
    %v515 = vpop.f32.mrf.mxu0
    %v516 = vadd.f32 %v180, %v515
    %v517 = vpop.f32.mrf.mxu0
    %v518 = vadd.f32 %v184, %v517
    %519 = vmatprep.mubr.bf16.mxu0 0
    %520 = vmatmul.mubr.bf16.gmra.mxu0 %v149
    %v521 = vpop.f32.mrf.mxu0
    %v522 = vadd.f32 %v180, %v521
    %v523 = vpop.f32.mrf.mxu0
    %v524 = vadd.f32 %v184, %v523
    %v525 = vpop.f32.mrf.mxu0
    %v526 = vadd.f32 %v180, %v525
    %v527 = vpop.f32.mrf.mxu0
    %v528 = vadd.f32 %v184, %v527
    %529 = vmatprep.mubr.bf16.mxu0 0
    %530 = vmatmul.mubr.bf16.gmra.mxu0 %v150
    %v531 = vpop.f32.mrf.mxu0
    %v532 = vadd.f32 %v180, %v531
    %v533 = vpop.f32.mrf.mxu0
    %v534 = vadd.f32 %v184, %v533
    %v535 = vpop.f32.mrf.mxu0
    %v536 = vadd.f32 %v180, %v535
    %v537 = vpop.f32.mrf.mxu0
    %v538 = vadd.f32 %v184, %v537
    %539 = vmatprep.mubr.bf16.mxu0 0
    %540 = vmatmul.mubr.bf16.gmra.mxu0 %v151
    %v541 = vpop.f32.mrf.mxu0
    %v542 = vadd.f32 %v180, %v541
    %v543 = vpop.f32.mrf.mxu0
    %v544 = vadd.f32 %v184, %v543
    %v545 = vpop.f32.mrf.mxu0
    %v546 = vadd.f32 %v180, %v545
    %v547 = vpop.f32.mrf.mxu0
    %v548 = vadd.f32 %v184, %v547
    %549 = vmatprep.mubr.bf16.mxu0 0
    %550 = vmatmul.mubr.bf16.gmra.mxu0 %v152
    %v551 = vpop.f32.mrf.mxu0
    %v552 = vadd.f32 %v180, %v551
    %v553 = vpop.f32.mrf.mxu0
    %v554 = vadd.f32 %v184, %v553
    %v555 = vpop.f32.mrf.mxu0
    %v556 = vadd.f32 %v180, %v555
    %v557 = vpop.f32.mrf.mxu0
    %v558 = vadd.f32 %v184, %v557
    %559 = vmatprep.mubr.bf16.mxu0 0
    %560 = vmatmul.mubr.bf16.gmra.mxu0 %v153
    %v561 = vpop.f32.mrf.mxu0
    %v562 = vadd.f32 %v180, %v561
    %v563 = vpop.f32.mrf.mxu0
    %v564 = vadd.f32 %v184, %v563
    %v565 = vpop.f32.mrf.mxu0
    %v566 = vadd.f32 %v180, %v565
    %v567 = vpop.f32.mrf.mxu0
    %v568 = vadd.f32 %v184, %v567
    %569 = vmatprep.mubr.bf16.mxu0 0
    %570 = vmatmul.mubr.bf16.gmra.mxu0 %v154
    %v571 = vpop.f32.mrf.mxu0
    %v572 = vadd.f32 %v180, %v571
    %v573 = vpop.f32.mrf.mxu0
    %v574 = vadd.f32 %v184, %v573
    %v575 = vpop.f32.mrf.mxu0
    %v576 = vadd.f32 %v180, %v575
    %v577 = vpop.f32.mrf.mxu0
    %v578 = vadd.f32 %v184, %v577
    %579 = vmatprep.mubr.bf16.mxu0 0
    %580 = vmatmul.mubr.bf16.gmra.mxu0 %v155
    %v581 = vpop.f32.mrf.mxu0
    %v582 = vadd.f32 %v180, %v581
    %v583 = vpop.f32.mrf.mxu0
    %v584 = vadd.f32 %v184, %v583
    %v585 = vpop.f32.mrf.mxu0
    %v586 = vadd.f32 %v180, %v585
    %v587 = vpop.f32.mrf.mxu0
    %v588 = vadd.f32 %v184, %v587
    %589 = vmatprep.mubr.bf16.mxu0 0
    %590 = vmatmul.mubr.bf16.gmra.mxu0 %v156
    %v591 = vpop.f32.mrf.mxu0
    %v592 = vadd.f32 %v180, %v591
    %v593 = vpop.f32.mrf.mxu0
    %v594 = vadd.f32 %v184, %v593
    %v595 = vpop.f32.mrf.mxu0
    %v596 = vadd.f32 %v180, %v595
    %v597 = vpop.f32.mrf.mxu0
    %v598 = vadd.f32 %v184, %v597
    %599 = vmatprep.mubr.bf16.mxu0 0
    %600 = vmatmul.mubr.bf16.gmra.mxu0 %v157
    %v601 = vpop.f32.mrf.mxu0
    %v602 = vadd.f32 %v180, %v601
    %v603 = vpop.f32.mrf.mxu0
    %v604 = vadd.f32 %v184, %v603
    %v605 = vpop.f32.mrf.mxu0
    %v606 = vadd.f32 %v180, %v605
    %v607 = vpop.f32.mrf.mxu0
    %v608 = vadd.f32 %v184, %v607
    %609 = vmatprep.mubr.bf16.mxu0 0
    %610 = vmatmul.mubr.bf16.gmra.mxu0 %v158
    %v611 = vpop.f32.mrf.mxu0
    %v612 = vadd.f32 %v180, %v611
    %v613 = vpop.f32.mrf.mxu0
    %v614 = vadd.f32 %v184, %v613
    %v615 = vpop.f32.mrf.mxu0
    %v616 = vadd.f32 %v180, %v615
    %v617 = vpop.f32.mrf.mxu0
    %v618 = vadd.f32 %v184, %v617
    %619 = vdwg.mxu0
    %v620 = vmax.f32 %v302, 0.0
    %v621 = vmax.f32 %v304, 0.0
    %v622 = vmax.f32 %v306, 0.0
    %v623 = vmax.f32 %v308, 0.0
    %v624 = vmax.f32 %v312, 0.0
    %v625 = vmax.f32 %v314, 0.0
    %v626 = vmax.f32 %v316, 0.0
    %v627 = vmax.f32 %v318, 0.0
    %v628 = vmax.f32 %v322, 0.0
    %v629 = vmax.f32 %v324, 0.0
    %v630 = vmax.f32 %v326, 0.0
    %v631 = vmax.f32 %v328, 0.0
    %v632 = vmax.f32 %v332, 0.0
    %v633 = vmax.f32 %v334, 0.0
    %v634 = vmax.f32 %v336, 0.0
    %v635 = vmax.f32 %v338, 0.0
    %v636 = vmax.f32 %v342, 0.0
    %v637 = vmax.f32 %v344, 0.0
    %v638 = vmax.f32 %v346, 0.0
    %v639 = vmax.f32 %v348, 0.0
    %v640 = vmax.f32 %v352, 0.0
    %v641 = vmax.f32 %v354, 0.0
    %v642 = vmax.f32 %v356, 0.0
    %v643 = vmax.f32 %v358, 0.0
    %v644 = vmax.f32 %v362, 0.0
    %v645 = vmax.f32 %v364, 0.0
    %v646 = vmax.f32 %v366, 0.0
    %v647 = vmax.f32 %v368, 0.0
    %v648 = vmax.f32 %v372, 0.0
    %v649 = vmax.f32 %v374, 0.0
    %v650 = vmax.f32 %v376, 0.0
    %v651 = vmax.f32 %v378, 0.0
    %v652 = vmax.f32 %v382, 0.0
    %v653 = vmax.f32 %v384, 0.0
    %v654 = vmax.f32 %v386, 0.0
    %v655 = vmax.f32 %v388, 0.0
    %v656 = vmax.f32 %v392, 0.0
    %v657 = vmax.f32 %v394, 0.0
    %v658 = vmax.f32 %v396, 0.0
    %v659 = vmax.f32 %v398, 0.0
    %v660 = vmax.f32 %v402, 0.0
    %v661 = vmax.f32 %v404, 0.0
    %v662 = vmax.f32 %v406, 0.0
    %v663 = vmax.f32 %v408, 0.0
    %v664 = vmax.f32 %v412, 0.0
    %v665 = vmax.f32 %v414, 0.0
    %v666 = vmax.f32 %v416, 0.0
    %v667 = vmax.f32 %v418, 0.0
    %v668 = vmax.f32 %v422, 0.0
    %v669 = vmax.f32 %v424, 0.0
    %v670 = vmax.f32 %v426, 0.0
    %v671 = vmax.f32 %v428, 0.0
    %v672 = vmax.f32 %v432, 0.0
    %v673 = vmax.f32 %v434, 0.0
    %v674 = vmax.f32 %v436, 0.0
    %v675 = vmax.f32 %v438, 0.0
    %v676 = vmax.f32 %v442, 0.0
    %v677 = vmax.f32 %v444, 0.0
    %v678 = vmax.f32 %v446, 0.0
    %v679 = vmax.f32 %v448, 0.0
    %v680 = vmax.f32 %v452, 0.0
    %v681 = vmax.f32 %v454, 0.0
    %v682 = vmax.f32 %v456, 0.0
    %v683 = vmax.f32 %v458, 0.0
    %v684 = vmax.f32 %v462, 0.0
    %v685 = vmax.f32 %v464, 0.0
    %v686 = vmax.f32 %v466, 0.0
    %v687 = vmax.f32 %v468, 0.0
    %v688 = vmax.f32 %v472, 0.0
    %v689 = vmax.f32 %v474, 0.0
    %v690 = vmax.f32 %v476, 0.0
    %v691 = vmax.f32 %v478, 0.0
    %v692 = vmax.f32 %v482, 0.0
    %v693 = vmax.f32 %v484, 0.0
    %v694 = vmax.f32 %v486, 0.0
    %v695 = vmax.f32 %v488, 0.0
    %v696 = vmax.f32 %v492, 0.0
    %v697 = vmax.f32 %v494, 0.0
    %v698 = vmax.f32 %v496, 0.0
    %v699 = vmax.f32 %v498, 0.0
    %v700 = vmax.f32 %v502, 0.0
    %v701 = vmax.f32 %v504, 0.0
    %v702 = vmax.f32 %v506, 0.0
    %v703 = vmax.f32 %v508, 0.0
    %v704 = vmax.f32 %v512, 0.0
    %v705 = vmax.f32 %v514, 0.0
    %v706 = vmax.f32 %v516, 0.0
    %v707 = vmax.f32 %v518, 0.0
    %v708 = vmax.f32 %v522, 0.0
    %v709 = vmax.f32 %v524, 0.0
    %v710 = vmax.f32 %v526, 0.0
    %v711 = vmax.f32 %v528, 0.0
    %v712 = vmax.f32 %v532, 0.0
    %v713 = vmax.f32 %v534, 0.0
    %v714 = vmax.f32 %v536, 0.0
    %v715 = vmax.f32 %v538, 0.0
    %v716 = vmax.f32 %v542, 0.0
    %v717 = vmax.f32 %v544, 0.0
    %v718 = vmax.f32 %v546, 0.0
    %v719 = vmax.f32 %v548, 0.0
    %v720 = vmax.f32 %v552, 0.0
    %v721 = vmax.f32 %v554, 0.0
    %v722 = vmax.f32 %v556, 0.0
    %v723 = vmax.f32 %v558, 0.0
    %v724 = vmax.f32 %v562, 0.0
    %v725 = vmax.f32 %v564, 0.0
    %v726 = vmax.f32 %v566, 0.0
    %v727 = vmax.f32 %v568, 0.0
    %v728 = vmax.f32 %v572, 0.0
    %v729 = vmax.f32 %v574, 0.0
    %v730 = vmax.f32 %v576, 0.0
    %v731 = vmax.f32 %v578, 0.0
    %v732 = vmax.f32 %v582, 0.0
    %v733 = vmax.f32 %v584, 0.0
    %v734 = vmax.f32 %v586, 0.0
    %v735 = vmax.f32 %v588, 0.0
    %v736 = vmax.f32 %v592, 0.0
    %v737 = vmax.f32 %v594, 0.0
    %v738 = vmax.f32 %v596, 0.0
    %v739 = vmax.f32 %v598, 0.0
    %v740 = vmax.f32 %v602, 0.0
    %v741 = vmax.f32 %v604, 0.0
    %v742 = vmax.f32 %v606, 0.0
    %v743 = vmax.f32 %v608, 0.0
    %v744 = vmax.f32 %v612, 0.0
    %v745 = vmax.f32 %v614, 0.0
    %v746 = vmax.f32 %v616, 0.0
    %v747 = vmax.f32 %v618, 0.0
    %v748 = vpack.c.bf16 %v622, %v620
    %v749 = vpack.c.bf16 %v623, %v621
    %v750 = vpack.c.bf16 %v626, %v624
    %v751 = vpack.c.bf16 %v627, %v625
    %v752 = vpack.c.bf16 %v630, %v628
    %v753 = vpack.c.bf16 %v631, %v629
    %v754 = vpack.c.bf16 %v634, %v632
    %v755 = vpack.c.bf16 %v635, %v633
    %v756 = vpack.c.bf16 %v638, %v636
    %v757 = vpack.c.bf16 %v639, %v637
    %v758 = vpack.c.bf16 %v642, %v640
    %v759 = vpack.c.bf16 %v643, %v641
    %v760 = vpack.c.bf16 %v646, %v644
    %v761 = vpack.c.bf16 %v647, %v645
    %v762 = vpack.c.bf16 %v650, %v648
    %v763 = vpack.c.bf16 %v651, %v649
    %v764 = vpack.c.bf16 %v654, %v652
    %v765 = vpack.c.bf16 %v655, %v653
    %v766 = vpack.c.bf16 %v658, %v656
    %v767 = vpack.c.bf16 %v659, %v657
    %v768 = vpack.c.bf16 %v662, %v660
    %v769 = vpack.c.bf16 %v663, %v661
    %v770 = vpack.c.bf16 %v666, %v664
    %v771 = vpack.c.bf16 %v667, %v665
    %v772 = vpack.c.bf16 %v670, %v668
    %v773 = vpack.c.bf16 %v671, %v669
    %v774 = vpack.c.bf16 %v674, %v672
    %v775 = vpack.c.bf16 %v675, %v673
    %v776 = vpack.c.bf16 %v678, %v676
    %v777 = vpack.c.bf16 %v679, %v677
    %v778 = vpack.c.bf16 %v682, %v680
    %v779 = vpack.c.bf16 %v683, %v681
    %v780 = vpack.c.bf16 %v686, %v684
    %v781 = vpack.c.bf16 %v687, %v685
    %v782 = vpack.c.bf16 %v690, %v688
    %v783 = vpack.c.bf16 %v691, %v689
    %v784 = vpack.c.bf16 %v694, %v692
    %v785 = vpack.c.bf16 %v695, %v693
    %v786 = vpack.c.bf16 %v698, %v696
    %v787 = vpack.c.bf16 %v699, %v697
    %v788 = vpack.c.bf16 %v702, %v700
    %v789 = vpack.c.bf16 %v703, %v701
    %v790 = vpack.c.bf16 %v706, %v704
    %v791 = vpack.c.bf16 %v707, %v705
    %v792 = vpack.c.bf16 %v710, %v708
    %v793 = vpack.c.bf16 %v711, %v709
    %v794 = vpack.c.bf16 %v714, %v712
    %v795 = vpack.c.bf16 %v715, %v713
    %v796 = vpack.c.bf16 %v718, %v716
    %v797 = vpack.c.bf16 %v719, %v717
    %v798 = vpack.c.bf16 %v722, %v720
    %v799 = vpack.c.bf16 %v723, %v721
    %v800 = vpack.c.bf16 %v726, %v724
    %v801 = vpack.c.bf16 %v727, %v725
    %v802 = vpack.c.bf16 %v730, %v728
    %v803 = vpack.c.bf16 %v731, %v729
    %v804 = vpack.c.bf16 %v734, %v732
    %v805 = vpack.c.bf16 %v735, %v733
    %v806 = vpack.c.bf16 %v738, %v736
    %v807 = vpack.c.bf16 %v739, %v737
    %v808 = vpack.c.bf16 %v742, %v740
    %v809 = vpack.c.bf16 %v743, %v741
    %v810 = vpack.c.bf16 %v746, %v744
    %v811 = vpack.c.bf16 %v747, %v745
    %v812 = vld [vmem:[#allocation7] sm:$0xf]
    %v813 = vld [vmem:[#allocation7 + $0x4] sm:$0xf]
    %v814 = vld [vmem:[#allocation7 + $0x8] sm:$0xf]
    %v815 = vld [vmem:[#allocation7 + $0xc] sm:$0xf]
    %v816 = vld [vmem:[#allocation7 + $0x10] sm:$0xf]
    %v817 = vld [vmem:[#allocation7 + $0x14] sm:$0xf]
    %v818 = vld [vmem:[#allocation7 + $0x18] sm:$0xf]
    %v819 = vld [vmem:[#allocation7 + $0x1c] sm:$0xf]
    %v820 = vld [vmem:[#allocation7 + $0x20] sm:$0xf]
    %v821 = vld [vmem:[#allocation7 + $0x24] sm:$0xf]
    %v822 = vld [vmem:[#allocation7 + $0x28] sm:$0xf]
    %v823 = vld [vmem:[#allocation7 + $0x2c] sm:$0xf]
    %v824 = vld [vmem:[#allocation7 + $0x30] sm:$0xf]
    %v825 = vld [vmem:[#allocation7 + $0x34] sm:$0xf]
    %v826 = vld [vmem:[#allocation7 + $0x38] sm:$0xf]
    %v827 = vld [vmem:[#allocation7 + $0x3c] sm:$0xf]
    %v828 = vld [vmem:[#allocation7 + $0x40] sm:$0xf]
    %v829 = vld [vmem:[#allocation7 + $0x44] sm:$0xf]
    %v830 = vld [vmem:[#allocation7 + $0x48] sm:$0xf]
    %v831 = vld [vmem:[#allocation7 + $0x4c] sm:$0xf]
    %v832 = vld [vmem:[#allocation7 + $0x50] sm:$0xf]
    %v833 = vld [vmem:[#allocation7 + $0x54] sm:$0xf]
    %v834 = vld [vmem:[#allocation7 + $0x58] sm:$0xf]
    %v835 = vld [vmem:[#allocation7 + $0x5c] sm:$0xf]
    %v836 = vld [vmem:[#allocation7 + $0x60] sm:$0xf]
    %v837 = vld [vmem:[#allocation7 + $0x64] sm:$0xf]
    %v838 = vld [vmem:[#allocation7 + $0x68] sm:$0xf]
    %v839 = vld [vmem:[#allocation7 + $0x6c] sm:$0xf]
    %v840 = vld [vmem:[#allocation7 + $0x70] sm:$0xf]
    %v841 = vld [vmem:[#allocation7 + $0x74] sm:$0xf]
    %v842 = vld [vmem:[#allocation7 + $0x78] sm:$0xf]
    %v843 = vld [vmem:[#allocation7 + $0x7c] sm:$0xf]
    %v844 = vld [vmem:[%s4] sm:$0x1]
    %v846 = vlaneseq
    %v847 = vshrl.u32 %v846, 7
    %v848 = vsub.s32 0, %v847
    %v849 = vrot.slane %v844, %v848
    %v883 = vunpack.c.l.b16 %v812
    %v884 = vunpack.c.l.b16 %v813
    %v885 = vunpack.c.l.b16 %v814
    %v886 = vunpack.c.l.b16 %v815
    %v887 = vunpack.c.l.b16 %v816
    %v888 = vunpack.c.l.b16 %v817
    %v889 = vunpack.c.l.b16 %v818
    %v890 = vunpack.c.l.b16 %v819
    %v891 = vunpack.c.l.b16 %v820
    %v892 = vunpack.c.l.b16 %v821
    %v893 = vunpack.c.l.b16 %v822
    %v894 = vunpack.c.l.b16 %v823
    %v895 = vunpack.c.l.b16 %v824
    %v896 = vunpack.c.l.b16 %v825
    %v897 = vunpack.c.l.b16 %v826
    %v898 = vunpack.c.l.b16 %v827
    %v899 = vunpack.c.l.b16 %v828
    %v900 = vunpack.c.l.b16 %v829
    %v901 = vunpack.c.l.b16 %v830
    %v902 = vunpack.c.l.b16 %v831
    %v903 = vunpack.c.l.b16 %v832
    %v904 = vunpack.c.l.b16 %v833
    %v905 = vunpack.c.l.b16 %v834
    %v906 = vunpack.c.l.b16 %v835
    %v907 = vunpack.c.l.b16 %v836
    %v908 = vunpack.c.l.b16 %v837
    %v909 = vunpack.c.l.b16 %v838
    %v910 = vunpack.c.l.b16 %v839
    %v911 = vunpack.c.l.b16 %v840
    %v912 = vunpack.c.l.b16 %v841
    %v913 = vunpack.c.l.b16 %v842
    %v914 = vunpack.c.l.b16 %v843
    %v915 = vpack.c.b16 %v884, %v883
    %v916 = vpack.c.b16 %v886, %v885
    %v917 = vpack.c.b16 %v888, %v887
    %v918 = vpack.c.b16 %v890, %v889
    %v919 = vpack.c.b16 %v892, %v891
    %v920 = vpack.c.b16 %v894, %v893
    %v921 = vpack.c.b16 %v896, %v895
    %v922 = vpack.c.b16 %v898, %v897
    %v923 = vpack.c.b16 %v900, %v899
    %v924 = vpack.c.b16 %v902, %v901
    %v925 = vpack.c.b16 %v904, %v903
    %v926 = vpack.c.b16 %v906, %v905
    %v927 = vpack.c.b16 %v908, %v907
    %v928 = vpack.c.b16 %v910, %v909
    %v929 = vpack.c.b16 %v912, %v911
    %v930 = vpack.c.b16 %v914, %v913
    %947 = vmatprep.subr.bf16.mxu0 0
    %948 = vmatpush1.bf16.msra.mxu0 %v922
    %949 = vmatprep.subr.bf16.mxu0 0
    %950 = vmatpush1.bf16.msra.mxu0 %v921
    %951 = vmatprep.subr.bf16.mxu0 0
    %952 = vmatpush1.bf16.msra.mxu0 %v920
    %953 = vmatprep.subr.bf16.mxu0 0
    %954 = vmatpush1.bf16.msra.mxu0 %v919
    %955 = vmatprep.subr.bf16.mxu0 0
    %956 = vmatpush1.bf16.msra.mxu0 %v918
    %957 = vmatprep.subr.bf16.mxu0 0
    %958 = vmatpush1.bf16.msra.mxu0 %v917
    %959 = vmatprep.subr.bf16.mxu0 0
    %960 = vmatpush1.bf16.msra.mxu0 %v916
    %961 = vmatprep.subr.bf16.mxu0 0
    %962 = vmatpush1.bf16.msra.mxu0 %v915
    %963 = vmatprep.subr.bf16.mxu0 0
    %964 = vmatpush2.bf16.msra.mxu0 %v930
    %965 = vmatprep.subr.bf16.mxu0 0
    %966 = vmatpush2.bf16.msra.mxu0 %v929
    %967 = vmatprep.subr.bf16.mxu0 0
    %968 = vmatpush2.bf16.msra.mxu0 %v928
    %969 = vmatprep.subr.bf16.mxu0 0
    %970 = vmatpush2.bf16.msra.mxu0 %v927
    %971 = vmatprep.subr.bf16.mxu0 0
    %972 = vmatpush2.bf16.msra.mxu0 %v926
    %973 = vmatprep.subr.bf16.mxu0 0
    %974 = vmatpush2.bf16.msra.mxu0 %v925
    %975 = vmatprep.subr.bf16.mxu0 0
    %976 = vmatpush2.bf16.msra.mxu0 %v924
    %977 = vmatprep.subr.bf16.mxu0 0
    %978 = vmatpush2.bf16.msra.mxu0 %v923
    %979 = vmatprep.mubr.bf16.mxu0 %v749
    %980 = vmatmul.mubr.bf16.gmra.mxu0 %v748
    %v981 = vpop.f32.mrf.mxu0
    %v982 = vadd.f32 %v849, %v981
    %v983 = vpop.f32.mrf.mxu0
    %v984 = vpop.f32.mrf.mxu0
    %v985 = vadd.f32 %v849, %v984
    %v986 = vpop.f32.mrf.mxu0
    %987 = vmatprep.mubr.bf16.mxu0 %v751
    %988 = vmatmul.mubr.bf16.gmra.mxu0 %v750
    %v989 = vpop.f32.mrf.mxu0
    %v990 = vadd.f32 %v849, %v989
    %v991 = vpop.f32.mrf.mxu0
    %v992 = vpop.f32.mrf.mxu0
    %v993 = vadd.f32 %v849, %v992
    %v994 = vpop.f32.mrf.mxu0
    %995 = vmatprep.mubr.bf16.mxu0 %v753
    %996 = vmatmul.mubr.bf16.gmra.mxu0 %v752
    %v997 = vpop.f32.mrf.mxu0
    %v998 = vadd.f32 %v849, %v997
    %v999 = vpop.f32.mrf.mxu0
    %v1000 = vpop.f32.mrf.mxu0
    %v1001 = vadd.f32 %v849, %v1000
    %v1002 = vpop.f32.mrf.mxu0
    %1003 = vmatprep.mubr.bf16.mxu0 %v755
    %1004 = vmatmul.mubr.bf16.gmra.mxu0 %v754
    %v1005 = vpop.f32.mrf.mxu0
    %v1006 = vadd.f32 %v849, %v1005
    %v1007 = vpop.f32.mrf.mxu0
    %v1008 = vpop.f32.mrf.mxu0
    %v1009 = vadd.f32 %v849, %v1008
    %v1010 = vpop.f32.mrf.mxu0
    %1011 = vmatprep.mubr.bf16.mxu0 %v757
    %1012 = vmatmul.mubr.bf16.gmra.mxu0 %v756
    %v1013 = vpop.f32.mrf.mxu0
    %v1014 = vadd.f32 %v849, %v1013
    %v1015 = vpop.f32.mrf.mxu0
    %v1016 = vpop.f32.mrf.mxu0
    %v1017 = vadd.f32 %v849, %v1016
    %v1018 = vpop.f32.mrf.mxu0
    %1019 = vmatprep.mubr.bf16.mxu0 %v759
    %1020 = vmatmul.mubr.bf16.gmra.mxu0 %v758
    %v1021 = vpop.f32.mrf.mxu0
    %v1022 = vadd.f32 %v849, %v1021
    %v1023 = vpop.f32.mrf.mxu0
    %v1024 = vpop.f32.mrf.mxu0
    %v1025 = vadd.f32 %v849, %v1024
    %v1026 = vpop.f32.mrf.mxu0
    %1027 = vmatprep.mubr.bf16.mxu0 %v761
    %1028 = vmatmul.mubr.bf16.gmra.mxu0 %v760
    %v1029 = vpop.f32.mrf.mxu0
    %v1030 = vadd.f32 %v849, %v1029
    %v1031 = vpop.f32.mrf.mxu0
    %v1032 = vpop.f32.mrf.mxu0
    %v1033 = vadd.f32 %v849, %v1032
    %v1034 = vpop.f32.mrf.mxu0
    %1035 = vmatprep.mubr.bf16.mxu0 %v763
    %1036 = vmatmul.mubr.bf16.gmra.mxu0 %v762
    %v1037 = vpop.f32.mrf.mxu0
    %v1038 = vadd.f32 %v849, %v1037
    %v1039 = vpop.f32.mrf.mxu0
    %v1040 = vpop.f32.mrf.mxu0
    %v1041 = vadd.f32 %v849, %v1040
    %v1042 = vpop.f32.mrf.mxu0
    %1043 = vmatprep.mubr.bf16.mxu0 %v765
    %1044 = vmatmul.mubr.bf16.gmra.mxu0 %v764
    %v1045 = vpop.f32.mrf.mxu0
    %v1046 = vadd.f32 %v849, %v1045
    %v1047 = vpop.f32.mrf.mxu0
    %v1048 = vpop.f32.mrf.mxu0
    %v1049 = vadd.f32 %v849, %v1048
    %v1050 = vpop.f32.mrf.mxu0
    %1051 = vmatprep.mubr.bf16.mxu0 %v767
    %1052 = vmatmul.mubr.bf16.gmra.mxu0 %v766
    %v1053 = vpop.f32.mrf.mxu0
    %v1054 = vadd.f32 %v849, %v1053
    %v1055 = vpop.f32.mrf.mxu0
    %v1056 = vpop.f32.mrf.mxu0
    %v1057 = vadd.f32 %v849, %v1056
    %v1058 = vpop.f32.mrf.mxu0
    %1059 = vmatprep.mubr.bf16.mxu0 %v769
    %1060 = vmatmul.mubr.bf16.gmra.mxu0 %v768
    %v1061 = vpop.f32.mrf.mxu0
    %v1062 = vadd.f32 %v849, %v1061
    %v1063 = vpop.f32.mrf.mxu0
    %v1064 = vpop.f32.mrf.mxu0
    %v1065 = vadd.f32 %v849, %v1064
    %v1066 = vpop.f32.mrf.mxu0
    %1067 = vmatprep.mubr.bf16.mxu0 %v771
    %1068 = vmatmul.mubr.bf16.gmra.mxu0 %v770
    %v1069 = vpop.f32.mrf.mxu0
    %v1070 = vadd.f32 %v849, %v1069
    %v1071 = vpop.f32.mrf.mxu0
    %v1072 = vpop.f32.mrf.mxu0
    %v1073 = vadd.f32 %v849, %v1072
    %v1074 = vpop.f32.mrf.mxu0
    %1075 = vmatprep.mubr.bf16.mxu0 %v773
    %1076 = vmatmul.mubr.bf16.gmra.mxu0 %v772
    %v1077 = vpop.f32.mrf.mxu0
    %v1078 = vadd.f32 %v849, %v1077
    %v1079 = vpop.f32.mrf.mxu0
    %v1080 = vpop.f32.mrf.mxu0
    %v1081 = vadd.f32 %v849, %v1080
    %v1082 = vpop.f32.mrf.mxu0
    %1083 = vmatprep.mubr.bf16.mxu0 %v775
    %1084 = vmatmul.mubr.bf16.gmra.mxu0 %v774
    %v1085 = vpop.f32.mrf.mxu0
    %v1086 = vadd.f32 %v849, %v1085
    %v1087 = vpop.f32.mrf.mxu0
    %v1088 = vpop.f32.mrf.mxu0
    %v1089 = vadd.f32 %v849, %v1088
    %v1090 = vpop.f32.mrf.mxu0
    %1091 = vmatprep.mubr.bf16.mxu0 %v777
    %1092 = vmatmul.mubr.bf16.gmra.mxu0 %v776
    %v1093 = vpop.f32.mrf.mxu0
    %v1094 = vadd.f32 %v849, %v1093
    %v1095 = vpop.f32.mrf.mxu0
    %v1096 = vpop.f32.mrf.mxu0
    %v1097 = vadd.f32 %v849, %v1096
    %v1098 = vpop.f32.mrf.mxu0
    %1099 = vmatprep.mubr.bf16.mxu0 %v779
    %1100 = vmatmul.mubr.bf16.gmra.mxu0 %v778
    %v1101 = vpop.f32.mrf.mxu0
    %v1102 = vadd.f32 %v849, %v1101
    %v1103 = vpop.f32.mrf.mxu0
    %v1104 = vpop.f32.mrf.mxu0
    %v1105 = vadd.f32 %v849, %v1104
    %v1106 = vpop.f32.mrf.mxu0
    %1107 = vmatprep.mubr.bf16.mxu0 %v781
    %1108 = vmatmul.mubr.bf16.gmra.mxu0 %v780
    %v1109 = vpop.f32.mrf.mxu0
    %v1110 = vadd.f32 %v849, %v1109
    %v1111 = vpop.f32.mrf.mxu0
    %v1112 = vpop.f32.mrf.mxu0
    %v1113 = vadd.f32 %v849, %v1112
    %v1114 = vpop.f32.mrf.mxu0
    %1115 = vmatprep.mubr.bf16.mxu0 %v783
    %1116 = vmatmul.mubr.bf16.gmra.mxu0 %v782
    %v1117 = vpop.f32.mrf.mxu0
    %v1118 = vadd.f32 %v849, %v1117
    %v1119 = vpop.f32.mrf.mxu0
    %v1120 = vpop.f32.mrf.mxu0
    %v1121 = vadd.f32 %v849, %v1120
    %v1122 = vpop.f32.mrf.mxu0
    %1123 = vmatprep.mubr.bf16.mxu0 %v785
    %1124 = vmatmul.mubr.bf16.gmra.mxu0 %v784
    %v1125 = vpop.f32.mrf.mxu0
    %v1126 = vadd.f32 %v849, %v1125
    %v1127 = vpop.f32.mrf.mxu0
    %v1128 = vpop.f32.mrf.mxu0
    %v1129 = vadd.f32 %v849, %v1128
    %v1130 = vpop.f32.mrf.mxu0
    %1131 = vmatprep.mubr.bf16.mxu0 %v787
    %1132 = vmatmul.mubr.bf16.gmra.mxu0 %v786
    %v1133 = vpop.f32.mrf.mxu0
    %v1134 = vadd.f32 %v849, %v1133
    %v1135 = vpop.f32.mrf.mxu0
    %v1136 = vpop.f32.mrf.mxu0
    %v1137 = vadd.f32 %v849, %v1136
    %v1138 = vpop.f32.mrf.mxu0
    %1139 = vmatprep.mubr.bf16.mxu0 %v789
    %1140 = vmatmul.mubr.bf16.gmra.mxu0 %v788
    %v1141 = vpop.f32.mrf.mxu0
    %v1142 = vadd.f32 %v849, %v1141
    %v1143 = vpop.f32.mrf.mxu0
    %v1144 = vpop.f32.mrf.mxu0
    %v1145 = vadd.f32 %v849, %v1144
    %v1146 = vpop.f32.mrf.mxu0
    %1147 = vmatprep.mubr.bf16.mxu0 %v791
    %1148 = vmatmul.mubr.bf16.gmra.mxu0 %v790
    %v1149 = vpop.f32.mrf.mxu0
    %v1150 = vadd.f32 %v849, %v1149
    %v1151 = vpop.f32.mrf.mxu0
    %v1152 = vpop.f32.mrf.mxu0
    %v1153 = vadd.f32 %v849, %v1152
    %v1154 = vpop.f32.mrf.mxu0
    %1155 = vmatprep.mubr.bf16.mxu0 %v793
    %1156 = vmatmul.mubr.bf16.gmra.mxu0 %v792
    %v1157 = vpop.f32.mrf.mxu0
    %v1158 = vadd.f32 %v849, %v1157
    %v1159 = vpop.f32.mrf.mxu0
    %v1160 = vpop.f32.mrf.mxu0
    %v1161 = vadd.f32 %v849, %v1160
    %v1162 = vpop.f32.mrf.mxu0
    %1163 = vmatprep.mubr.bf16.mxu0 %v795
    %1164 = vmatmul.mubr.bf16.gmra.mxu0 %v794
    %v1165 = vpop.f32.mrf.mxu0
    %v1166 = vadd.f32 %v849, %v1165
    %v1167 = vpop.f32.mrf.mxu0
    %v1168 = vpop.f32.mrf.mxu0
    %v1169 = vadd.f32 %v849, %v1168
    %v1170 = vpop.f32.mrf.mxu0
    %1171 = vmatprep.mubr.bf16.mxu0 %v797
    %1172 = vmatmul.mubr.bf16.gmra.mxu0 %v796
    %v1173 = vpop.f32.mrf.mxu0
    %v1174 = vadd.f32 %v849, %v1173
    %v1175 = vpop.f32.mrf.mxu0
    %v1176 = vpop.f32.mrf.mxu0
    %v1177 = vadd.f32 %v849, %v1176
    %v1178 = vpop.f32.mrf.mxu0
    %1179 = vmatprep.mubr.bf16.mxu0 %v799
    %1180 = vmatmul.mubr.bf16.gmra.mxu0 %v798
    %v1181 = vpop.f32.mrf.mxu0
    %v1182 = vadd.f32 %v849, %v1181
    %v1183 = vpop.f32.mrf.mxu0
    %v1184 = vpop.f32.mrf.mxu0
    %v1185 = vadd.f32 %v849, %v1184
    %v1186 = vpop.f32.mrf.mxu0
    %1187 = vmatprep.mubr.bf16.mxu0 %v801
    %1188 = vmatmul.mubr.bf16.gmra.mxu0 %v800
    %v1189 = vpop.f32.mrf.mxu0
    %v1190 = vadd.f32 %v849, %v1189
    %v1191 = vpop.f32.mrf.mxu0
    %v1192 = vpop.f32.mrf.mxu0
    %v1193 = vadd.f32 %v849, %v1192
    %v1194 = vpop.f32.mrf.mxu0
    %1195 = vmatprep.mubr.bf16.mxu0 %v803
    %1196 = vmatmul.mubr.bf16.gmra.mxu0 %v802
    %v1197 = vpop.f32.mrf.mxu0
    %v1198 = vadd.f32 %v849, %v1197
    %v1199 = vpop.f32.mrf.mxu0
    %v1200 = vpop.f32.mrf.mxu0
    %v1201 = vadd.f32 %v849, %v1200
    %v1202 = vpop.f32.mrf.mxu0
    %1203 = vmatprep.mubr.bf16.mxu0 %v805
    %1204 = vmatmul.mubr.bf16.gmra.mxu0 %v804
    %v1205 = vpop.f32.mrf.mxu0
    %v1206 = vadd.f32 %v849, %v1205
    %v1207 = vpop.f32.mrf.mxu0
    %v1208 = vpop.f32.mrf.mxu0
    %v1209 = vadd.f32 %v849, %v1208
    %v1210 = vpop.f32.mrf.mxu0
    %1211 = vmatprep.mubr.bf16.mxu0 %v807
    %1212 = vmatmul.mubr.bf16.gmra.mxu0 %v806
    %v1213 = vpop.f32.mrf.mxu0
    %v1214 = vadd.f32 %v849, %v1213
    %v1215 = vpop.f32.mrf.mxu0
    %v1216 = vpop.f32.mrf.mxu0
    %v1217 = vadd.f32 %v849, %v1216
    %v1218 = vpop.f32.mrf.mxu0
    %1219 = vmatprep.mubr.bf16.mxu0 %v809
    %1220 = vmatmul.mubr.bf16.gmra.mxu0 %v808
    %v1221 = vpop.f32.mrf.mxu0
    %v1222 = vadd.f32 %v849, %v1221
    %v1223 = vpop.f32.mrf.mxu0
    %v1224 = vpop.f32.mrf.mxu0
    %v1225 = vadd.f32 %v849, %v1224
    %v1226 = vpop.f32.mrf.mxu0
    %1227 = vmatprep.mubr.bf16.mxu0 %v811
    %1228 = vmatmul.mubr.bf16.gmra.mxu0 %v810
    %v1229 = vpop.f32.mrf.mxu0
    %v1230 = vadd.f32 %v849, %v1229
    %v1231 = vpop.f32.mrf.mxu0
    %v1232 = vpop.f32.mrf.mxu0
    %v1233 = vadd.f32 %v849, %v1232
    %v1234 = vpop.f32.mrf.mxu0
    %1235 = vdwg.mxu0
    %1236 = vst [vmem:[#allocation8] sm:$0xff] %v982
    %1237 = vst [vmem:[#allocation8 + $0x8] sm:$0xff] %v985
    %1238 = vst [vmem:[#allocation8 + $0x10] sm:$0xff] %v990
    %1239 = vst [vmem:[#allocation8 + $0x18] sm:$0xff] %v993
    %1240 = vst [vmem:[#allocation8 + $0x20] sm:$0xff] %v998
    %1241 = vst [vmem:[#allocation8 + $0x28] sm:$0xff] %v1001
    %1242 = vst [vmem:[#allocation8 + $0x30] sm:$0xff] %v1006
    %1243 = vst [vmem:[#allocation8 + $0x38] sm:$0xff] %v1009
    %1244 = vst [vmem:[#allocation8 + $0x40] sm:$0xff] %v1014
    %1245 = vst [vmem:[#allocation8 + $0x48] sm:$0xff] %v1017
    %1246 = vst [vmem:[#allocation8 + $0x50] sm:$0xff] %v1022
    %1247 = vst [vmem:[#allocation8 + $0x58] sm:$0xff] %v1025
    %1248 = vst [vmem:[#allocation8 + $0x60] sm:$0xff] %v1030
    %1249 = vst [vmem:[#allocation8 + $0x68] sm:$0xff] %v1033
    %1250 = vst [vmem:[#allocation8 + $0x70] sm:$0xff] %v1038
    %1251 = vst [vmem:[#allocation8 + $0x78] sm:$0xff] %v1041
    %1252 = vst [vmem:[#allocation8 + $0x80] sm:$0xff] %v1046
    %1253 = vst [vmem:[#allocation8 + $0x88] sm:$0xff] %v1049
    %1254 = vst [vmem:[#allocation8 + $0x90] sm:$0xff] %v1054
    %1255 = vst [vmem:[#allocation8 + $0x98] sm:$0xff] %v1057
    %1256 = vst [vmem:[#allocation8 + $0xa0] sm:$0xff] %v1062
    %1257 = vst [vmem:[#allocation8 + $0xa8] sm:$0xff] %v1065
    %1258 = vst [vmem:[#allocation8 + $0xb0] sm:$0xff] %v1070
    %1259 = vst [vmem:[#allocation8 + $0xb8] sm:$0xff] %v1073
    %1260 = vst [vmem:[#allocation8 + $0xc0] sm:$0xff] %v1078
    %1261 = vst [vmem:[#allocation8 + $0xc8] sm:$0xff] %v1081
    %1262 = vst [vmem:[#allocation8 + $0xd0] sm:$0xff] %v1086
    %1263 = vst [vmem:[#allocation8 + $0xd8] sm:$0xff] %v1089
    %1264 = vst [vmem:[#allocation8 + $0xe0] sm:$0xff] %v1094
    %1265 = vst [vmem:[#allocation8 + $0xe8] sm:$0xff] %v1097
    %1266 = vst [vmem:[#allocation8 + $0xf0] sm:$0xff] %v1102
    %1267 = vst [vmem:[#allocation8 + $0xf8] sm:$0xff] %v1105
    %1268 = vst [vmem:[#allocation8 + $0x100] sm:$0xff] %v1110
    %1269 = vst [vmem:[#allocation8 + $0x108] sm:$0xff] %v1113
    %1270 = vst [vmem:[#allocation8 + $0x110] sm:$0xff] %v1118
    %1271 = vst [vmem:[#allocation8 + $0x118] sm:$0xff] %v1121
    %1272 = vst [vmem:[#allocation8 + $0x120] sm:$0xff] %v1126
    %1273 = vst [vmem:[#allocation8 + $0x128] sm:$0xff] %v1129
    %1274 = vst [vmem:[#allocation8 + $0x130] sm:$0xff] %v1134
    %1275 = vst [vmem:[#allocation8 + $0x138] sm:$0xff] %v1137
    %1276 = vst [vmem:[#allocation8 + $0x140] sm:$0xff] %v1142
    %1277 = vst [vmem:[#allocation8 + $0x148] sm:$0xff] %v1145
    %1278 = vst [vmem:[#allocation8 + $0x150] sm:$0xff] %v1150
    %1279 = vst [vmem:[#allocation8 + $0x158] sm:$0xff] %v1153
    %1280 = vst [vmem:[#allocation8 + $0x160] sm:$0xff] %v1158
    %1281 = vst [vmem:[#allocation8 + $0x168] sm:$0xff] %v1161
    %1282 = vst [vmem:[#allocation8 + $0x170] sm:$0xff] %v1166
    %1283 = vst [vmem:[#allocation8 + $0x178] sm:$0xff] %v1169
    %1284 = vst [vmem:[#allocation8 + $0x180] sm:$0xff] %v1174
    %1285 = vst [vmem:[#allocation8 + $0x188] sm:$0xff] %v1177
    %1286 = vst [vmem:[#allocation8 + $0x190] sm:$0xff] %v1182
    %1287 = vst [vmem:[#allocation8 + $0x198] sm:$0xff] %v1185
    %1288 = vst [vmem:[#allocation8 + $0x1a0] sm:$0xff] %v1190
    %1289 = vst [vmem:[#allocation8 + $0x1a8] sm:$0xff] %v1193
    %1290 = vst [vmem:[#allocation8 + $0x1b0] sm:$0xff] %v1198
    %1291 = vst [vmem:[#allocation8 + $0x1b8] sm:$0xff] %v1201
    %1292 = vst [vmem:[#allocation8 + $0x1c0] sm:$0xff] %v1206
    %1293 = vst [vmem:[#allocation8 + $0x1c8] sm:$0xff] %v1209
    %1294 = vst [vmem:[#allocation8 + $0x1d0] sm:$0xff] %v1214
    %1295 = vst [vmem:[#allocation8 + $0x1d8] sm:$0xff] %v1217
    %1296 = vst [vmem:[#allocation8 + $0x1e0] sm:$0xff] %v1222
    %1297 = vst [vmem:[#allocation8 + $0x1e8] sm:$0xff] %v1225
    %1298 = vst [vmem:[#allocation8 + $0x1f0] sm:$0xff] %v1230
    %1299 = vst [vmem:[#allocation8 + $0x1f8] sm:$0xff] %v1233
    // Predicated region
    $region34: #{_mlp_forward_padded.1} parent=1 // pred_check
      _
    $region35: #{_mlp_forward_padded.1} parent=1 // pred_check_branch
      %1301 = sbr.rel (0) target = $region37
    $region36: #{_mlp_forward_padded.1} parent=1 // pred_region
      %s1303 = ssub.s32 8192, 8192
      %1304 = vsyncadd [#allocation4], %s1303
      %s1305 = sshll.u32 [#allocation8], 4
      %s1306 = int_to_ptr.vmem [resolvable:$true] %s1305
      %1311 = dma.vmem_to_hbm [thread:$0]  %s1306, 8192, %s5, [#allocation4], 128, 128, 8
    $region37: #{_mlp_forward_padded.1} parent=1 // pred_fallthru
      _
    // Predicated region
    $region38: #{_mlp_forward_padded.1} parent=1 // pred_check
      _
    $region39: #{_mlp_forward_padded.1} parent=1 // pred_check_branch
      %1313 = sbr.rel (0) target = $region41
    $region40: #{_mlp_forward_padded.1} parent=1 // pred_region
      %1314 = dma.done [#allocation4], 8192
    $region41: #{_mlp_forward_padded.1} parent=1 // pred_fallthru
      _
    %1315 = vsyncpa [#allocation3], 1
    %1316 = vsyncpa [#allocation6], 1
    %1317 = vsyncpa [#allocation4], 1

</llo_original>
